<compile_context>
chip_gen: v7x
topology: tpu7x:2x2x1
jax: 0.10.0
libtpu: 0.0.40
codegen_flags: <defaults>
</compile_context>

<pallas_src>
import jax
import jax.numpy as jnp
from jax.experimental import pallas as pl
from jax.experimental.pallas import tpu as pltpu

SUBLANE = 8
MAX_TILE_N = 2048  # 2 x (2048 x 552 x 4B) double-buffered ~ 9 MiB: fits default scoped VMEM on v5e/v6e/v7x


def _round_up(v, m):
    return (v + m - 1) // m * m


def classifier_kernel(x_ref, w_ref, b_ref, o_ref):
    # x_ref: (TILE_N, K) f32   flattened input features (K = 8*1*69 = 552)
    # w_ref: (K, C)      f32   conv weight, packed once at init (resident across tiles)
    # b_ref: (1, C)      f32   conv bias
    # o_ref: (TILE_N, C) f32   log_softmax(x @ w + b, axis=-1)
    logits = jnp.dot(x_ref[...], w_ref[...],
                     preferred_element_type=jnp.float32) + b_ref[...]
    m = jnp.max(logits, axis=-1, keepdims=True)
    shifted = logits - m
    lse = jnp.log(jnp.sum(jnp.exp(shifted), axis=-1, keepdims=True))
    o_ref[...] = (shifted - lse).astype(o_ref.dtype)


def prepare_classifier_params(weight, bias):
    """One-time (init-time) parameter packing — NOT in the per-forward hot path.

    weight: (num_classes, 8, 1, 69) -> (K, num_classes) f32 (transpose happens exactly once)
    bias:   (num_classes,)          -> (1, num_classes) f32
    """
    c = weight.shape[0]
    k = weight.shape[1] * weight.shape[2] * weight.shape[3]
    w = weight.reshape(c, k).T.astype(jnp.float32)
    b = bias.reshape(1, c).astype(jnp.float32)
    return w, b


@jax.jit
def classifier_forward(x_nchw, w_packed, b_packed):
    """x_nchw: (N, 8, 1, 69) f32; w_packed: (K, C) f32; b_packed: (1, C) f32."""
    n = x_nchw.shape[0]
    k = x_nchw.shape[1] * x_nchw.shape[2] * x_nchw.shape[3]
    _, c = w_packed.shape

    # Free contiguous view — no copy, no cast, no pad in the hot path.
    x = x_nchw.reshape(n, k)

    # Batch tiling: guarantee >= 2 grid steps for medium/large batches (v7x megacore),
    # cap tile size so double-buffered tiles fit default scoped VMEM on all generations.
    tile_n = min(MAX_TILE_N, _round_up(max(pl.cdiv(n, 2), 1), SUBLANE))
    if tile_n >= n:
        tile_n = n  # tiny batch: single tile; block dim == full array dim (legal)

    grid = (pl.cdiv(n, tile_n),)  # ragged last tile: Pallas pads reads / masks writes

    cost = pl.CostEstimate(
        flops=2 * n * k * c,
        transcendentals=n * (c + 1),
        bytes_accessed=4 * (n * k + k * c + c + n * c),
    )

    out = pl.pallas_call(
        classifier_kernel,
        out_shape=jax.ShapeDtypeStruct((n, c), jnp.float32),
        grid=grid,
        in_specs=[
            pl.BlockSpec((tile_n, k), lambda i: (i, 0)),   # batch-tiled x, double-buffered
            pl.BlockSpec((k, c), lambda i: (0, 0)),        # weight resident across tiles
            pl.BlockSpec((1, c), lambda i: (0, 0)),        # bias resident across tiles
        ],
        out_specs=pl.BlockSpec((tile_n, c), lambda i: (i, 0)),
        compiler_params=pltpu.CompilerParams(
            dimension_semantics=("parallel",),  # megacore sharding on v7x; no-op on v5e/v6e
        ),
        cost_estimate=cost,
    )(x, w_packed, b_packed)

    return out  # (N, num_classes)


if __name__ == "__main__":
    num_classes = 4
    in_ch, h, w_spatial = 8, 1, 69  # conv kernel (1, 69) consumes the full spatial extent
    fan_in = in_ch * h * w_spatial

    key = jax.random.PRNGKey(0)
    kx, kw, kb = jax.random.split(key, 3)

    # Deterministic PyTorch-style uniform init: U(-1/sqrt(fan_in), 1/sqrt(fan_in))
    bound = 1.0 / (fan_in ** 0.5)
    weight = jax.random.uniform(kw, (num_classes, in_ch, h, w_spatial),
                                minval=-bound, maxval=bound, dtype=jnp.float32)
    bias = jax.random.uniform(kb, (num_classes,),
                              minval=-bound, maxval=bound, dtype=jnp.float32)

    # init-time packing (cached in real use), then the hot-path forward
    w_packed, b_packed = prepare_classifier_params(weight, bias)
    w_ref_mat = weight.reshape(num_classes, fan_in).T

    # Check both a tiny batch (single tile) and a ragged multi-tile batch.
    for batch in (2, 10):
        x = jax.random.normal(kx, (batch, in_ch, h, w_spatial), dtype=jnp.float32)
        out = classifier_forward(x, w_packed, b_packed)
        jax.block_until_ready(out)

        assert out.shape == (batch, num_classes)
        assert jnp.allclose(jnp.sum(jnp.exp(out), axis=-1), 1.0, atol=1e-5)
        ref = jax.nn.log_softmax(
            x.reshape(batch, fan_in) @ w_ref_mat + bias[None, :], axis=-1)
        assert jnp.allclose(out, ref, atol=1e-5), f"mismatch vs reference (batch={batch})"

    print("KERNEL_OK")
</pallas_src>

<mosaic_0001>
module attributes {stable_mosaic.version = 11 : i64} {
  func.func @classifier_kernel(%arg0: i32, %arg1: memref<2x552xf32, #tpu.memory_space<vmem>>, %arg2: memref<552x4xf32, #tpu.memory_space<vmem>>, %arg3: memref<1x4xf32, #tpu.memory_space<vmem>>, %arg4: memref<2x4xf32, #tpu.memory_space<vmem>>) attributes {dimension_semantics = [#tpu.dimension_semantics<parallel>], iteration_bounds = array<i64: 1>, scalar_prefetch = 0 : i64, scratch_operands = 0 : i64, tpu.core_type = #tpu.core_type<tc>, window_params = [{transform_indices = @transform_0, window_bounds = array<i64: 2, 552>}, {pipeline_mode = #tpu.pipeline_mode<synchronous>, transform_indices = @transform_1, window_bounds = array<i64: 552, 4>}, {pipeline_mode = #tpu.pipeline_mode<synchronous>, transform_indices = @transform_2, window_bounds = array<i64: 1, 4>}, {transform_indices = @transform_3, window_bounds = array<i64: 2, 4>}]} {
    %c0 = arith.constant 0 : index
    %c0_0 = arith.constant 0 : index
    %0 = vector.load %arg1[%c0, %c0_0] : memref<2x552xf32, #tpu.memory_space<vmem>>, vector<2x552xf32>
    %c0_1 = arith.constant 0 : index
    %c0_2 = arith.constant 0 : index
    %1 = vector.load %arg2[%c0_1, %c0_2] : memref<552x4xf32, #tpu.memory_space<vmem>>, vector<552x4xf32>
    %cst = arith.constant dense<0.000000e+00> : vector<2x4xf32>
    %2 = tpu.matmul %0, %1, %cst {dimension_numbers = #tpu.dot_dimension_numbers<[1], [0], [0], [1], [0, 0, 1, 1], [], []>} : vector<2x552xf32>, vector<552x4xf32>, vector<2x4xf32> -> vector<2x4xf32>
    %c0_3 = arith.constant 0 : index
    %c0_4 = arith.constant 0 : index
    %3 = vector.load %arg3[%c0_3, %c0_4] : memref<1x4xf32, #tpu.memory_space<vmem>>, vector<1x4xf32>
    %4 = vector.broadcast %3 : vector<1x4xf32> to vector<2x4xf32>
    %5 = arith.addf %2, %4 : vector<2x4xf32>
    %cst_5 = arith.constant dense<0xFF800000> : vector<2xf32>
    %6 = vector.multi_reduction <maximumf>, %5, %cst_5 [1] : vector<2x4xf32> to vector<2xf32>
    %7 = vector.shape_cast %6 : vector<2xf32> to vector<2x1xf32>
    %8 = vector.broadcast %7 : vector<2x1xf32> to vector<2x4xf32>
    %9 = arith.subf %5, %8 : vector<2x4xf32>
    %10 = math.exp %9 : vector<2x4xf32>
    %cst_6 = arith.constant dense<0.000000e+00> : vector<2xf32>
    %11 = vector.multi_reduction <add>, %10, %cst_6 [1] : vector<2x4xf32> to vector<2xf32>
    %12 = vector.shape_cast %11 : vector<2xf32> to vector<2x1xf32>
    %13 = math.log %12 : vector<2x1xf32>
    %14 = vector.broadcast %13 : vector<2x1xf32> to vector<2x4xf32>
    %15 = arith.subf %9, %14 : vector<2x4xf32>
    %c0_7 = arith.constant 0 : index
    %c0_8 = arith.constant 0 : index
    %16 = vector.load %arg4[%c0_7, %c0_8] : memref<2x4xf32, #tpu.memory_space<vmem>>, vector<2x4xf32>
    tpu.vector_store %arg4[%c0_7, %c0_8], %15 {strides = array<i32>} : memref<2x4xf32, #tpu.memory_space<vmem>>, vector<2x4xf32>,
    return
  }
  func.func @transform_0(%arg0: i32) -> (i32, i32) {
    %c0_i32 = arith.constant 0 : i32
    %c0_i32_0 = arith.constant 0 : i32
    return %arg0, %c0_i32 : i32, i32
  }
  func.func @transform_1(%arg0: i32) -> (i32, i32) {
    %c0_i32 = arith.constant 0 : i32
    %c0_i32_0 = arith.constant 0 : i32
    %c0_i32_1 = arith.constant 0 : i32
    return %c0_i32, %c0_i32_0 : i32, i32
  }
  func.func @transform_2(%arg0: i32) -> (i32, i32) {
    %c0_i32 = arith.constant 0 : i32
    %c0_i32_0 = arith.constant 0 : i32
    %c0_i32_1 = arith.constant 0 : i32
    return %c0_i32, %c0_i32_0 : i32, i32
  }
  func.func @transform_3(%arg0: i32) -> (i32, i32) {
    %c0_i32 = arith.constant 0 : i32
    %c0_i32_0 = arith.constant 0 : i32
    return %arg0, %c0_i32 : i32, i32
  }
}

</mosaic_0001>

<llo_original>
// kernel: classifier_forward.1
$region0: #{classifier_forward.1}
  #allocation0 [shape = 'u32[]', space=smem, size = 0x4, offset = 0x4, fixed_abs, tag = 'smem constant byte address 0x4 - core index']
  #allocation1 [shape = 'u32[144,128]{1,0:T(1,128)}', space=vmem, size = 0x12000, scoped, tag = 'internal scratch']
  %s0 = inlined_call_operand.vmem [shape: f32[2,552], index: 0, kind: input, shape index: {}]
  %s1 = inlined_call_operand.vmem [shape: f32[552,4], index: 1, kind: input, shape index: {}]
  %s2 = inlined_call_operand.vmem [shape: f32[1,4], index: 2, kind: input, shape index: {}]
  %s3 = inlined_call_operand.hbm [shape: f32[2,4], index: 3, kind: output, shape index: {}]
  %s4 = sld [smem:[#allocation0]]
  $region22: #{classifier_forward.1} parent=0
    _
  %s6 = ssub.s32 1, %s4
  %s7 = scalar_select 0, %s6, %s4
  $region1: #{classifier_forward.1} parent=0
    #allocation2 [shape = 'u8[1024]{0}', space=vmem, size = 0x400, scoped, tag = 'output window, operand 0, single buffered']
    #allocation3 [shape = 's32[1]{0}', space=sflag, size = 0x4, scoped, tag = 'scoped memory for classifier_forward.1']
    %8 = vsyncpa [#allocation3], 0
    // Predicated region
    $region2: #{classifier_forward.1} parent=1 // pred_check
      _
    $region3: #{classifier_forward.1} parent=1 // pred_check_branch
      %10 = sbr.rel (0) target = $region5
    $region4: #{classifier_forward.1} parent=1 // pred_region
      _
    $region5: #{classifier_forward.1} parent=1 // pred_fallthru
      _
    // Predicated region
    $region6: #{classifier_forward.1} parent=1 // pred_check
      _
    $region7: #{classifier_forward.1} parent=1 // pred_check_branch
      %12 = sbr.rel (0) target = $region9
    $region8: #{classifier_forward.1} parent=1 // pred_region
      _
    $region9: #{classifier_forward.1} parent=1 // pred_fallthru
      _
    // Predicated region
    $region10: #{classifier_forward.1} parent=1 // pred_check
      _
    $region11: #{classifier_forward.1} parent=1 // pred_check_branch
      %14 = sbr.rel (0) target = $region13
    $region12: #{classifier_forward.1} parent=1 // pred_region
      _
    $region13: #{classifier_forward.1} parent=1 // pred_fallthru
      _
    %v15 = vld [vmem:[%s0] sm:$0xff]
    %v16 = vld [vmem:[%s0 + $0x8] sm:$0x3]
    %v17 = vld [vmem:[%s1] sm:$0xff]
    %v18 = vld [vmem:[%s1 + $0x8] sm:$0xff]
    %v19 = vld [vmem:[%s1 + $0x10] sm:$0xff]
    %v20 = vld [vmem:[%s1 + $0x18] sm:$0xff]
    %v21 = vld [vmem:[%s1 + $0x20] sm:$0xff]
    %v22 = vld [vmem:[%s1 + $0x28] sm:$0xff]
    %v23 = vld [vmem:[%s1 + $0x30] sm:$0xff]
    %v24 = vld [vmem:[%s1 + $0x38] sm:$0xff]
    %v25 = vld [vmem:[%s1 + $0x40] sm:$0xff]
    %v26 = vld [vmem:[%s1 + $0x48] sm:$0xff]
    %v27 = vld [vmem:[%s1 + $0x50] sm:$0xff]
    %v28 = vld [vmem:[%s1 + $0x58] sm:$0xff]
    %v29 = vld [vmem:[%s1 + $0x60] sm:$0xff]
    %v30 = vld [vmem:[%s1 + $0x68] sm:$0xff]
    %v31 = vld [vmem:[%s1 + $0x70] sm:$0xff]
    %v32 = vld [vmem:[%s1 + $0x78] sm:$0xff]
    %v33 = vld [vmem:[%s1 + $0x80] sm:$0xff]
    %v34 = vld [vmem:[%s1 + $0x88] sm:$0xff]
    %v35 = vld [vmem:[%s1 + $0x90] sm:$0xff]
    %v36 = vld [vmem:[%s1 + $0x98] sm:$0xff]
    %v37 = vld [vmem:[%s1 + $0xa0] sm:$0xff]
    %v38 = vld [vmem:[%s1 + $0xa8] sm:$0xff]
    %v39 = vld [vmem:[%s1 + $0xb0] sm:$0xff]
    %v40 = vld [vmem:[%s1 + $0xb8] sm:$0xff]
    %v41 = vld [vmem:[%s1 + $0xc0] sm:$0xff]
    %v42 = vld [vmem:[%s1 + $0xc8] sm:$0xff]
    %v43 = vld [vmem:[%s1 + $0xd0] sm:$0xff]
    %v44 = vld [vmem:[%s1 + $0xd8] sm:$0xff]
    %v45 = vld [vmem:[%s1 + $0xe0] sm:$0xff]
    %v46 = vld [vmem:[%s1 + $0xe8] sm:$0xff]
    %v47 = vld [vmem:[%s1 + $0xf0] sm:$0xff]
    %v48 = vld [vmem:[%s1 + $0xf8] sm:$0xff]
    %v49 = vld [vmem:[%s1 + $0x100] sm:$0xff]
    %v50 = vld [vmem:[%s1 + $0x108] sm:$0xff]
    %v51 = vld [vmem:[%s1 + $0x110] sm:$0xff]
    %v52 = vld [vmem:[%s1 + $0x118] sm:$0xff]
    %v53 = vld [vmem:[%s1 + $0x120] sm:$0xff]
    %v54 = vld [vmem:[%s1 + $0x128] sm:$0xff]
    %v55 = vld [vmem:[%s1 + $0x130] sm:$0xff]
    %v56 = vld [vmem:[%s1 + $0x138] sm:$0xff]
    %v57 = vld [vmem:[%s1 + $0x140] sm:$0xff]
    %v58 = vld [vmem:[%s1 + $0x148] sm:$0xff]
    %v59 = vld [vmem:[%s1 + $0x150] sm:$0xff]
    %v60 = vld [vmem:[%s1 + $0x158] sm:$0xff]
    %v61 = vld [vmem:[%s1 + $0x160] sm:$0xff]
    %v62 = vld [vmem:[%s1 + $0x168] sm:$0xff]
    %v63 = vld [vmem:[%s1 + $0x170] sm:$0xff]
    %v64 = vld [vmem:[%s1 + $0x178] sm:$0xff]
    %v65 = vld [vmem:[%s1 + $0x180] sm:$0xff]
    %v66 = vld [vmem:[%s1 + $0x188] sm:$0xff]
    %v67 = vld [vmem:[%s1 + $0x190] sm:$0xff]
    %v68 = vld [vmem:[%s1 + $0x198] sm:$0xff]
    %v69 = vld [vmem:[%s1 + $0x1a0] sm:$0xff]
    %v70 = vld [vmem:[%s1 + $0x1a8] sm:$0xff]
    %v71 = vld [vmem:[%s1 + $0x1b0] sm:$0xff]
    %v72 = vld [vmem:[%s1 + $0x1b8] sm:$0xff]
    %v73 = vld [vmem:[%s1 + $0x1c0] sm:$0xff]
    %v74 = vld [vmem:[%s1 + $0x1c8] sm:$0xff]
    %v75 = vld [vmem:[%s1 + $0x1d0] sm:$0xff]
    %v76 = vld [vmem:[%s1 + $0x1d8] sm:$0xff]
    %v77 = vld [vmem:[%s1 + $0x1e0] sm:$0xff]
    %v78 = vld [vmem:[%s1 + $0x1e8] sm:$0xff]
    %v79 = vld [vmem:[%s1 + $0x1f0] sm:$0xff]
    %v80 = vld [vmem:[%s1 + $0x1f8] sm:$0xff]
    %v81 = vld [vmem:[%s1 + $0x200] sm:$0xff]
    %v82 = vld [vmem:[%s1 + $0x208] sm:$0xff]
    %v83 = vld [vmem:[%s1 + $0x210] sm:$0xff]
    %v84 = vld [vmem:[%s1 + $0x218] sm:$0xff]
    %v85 = vld [vmem:[%s1 + $0x220] sm:$0xff]
    %v86 = vld [vmem:[%s2] sm:$0x1]
    %v88 = vlaneseq
    %v89 = vshrl.u32 %v88, 7
    %v90 = vsub.s32 0, %v89
    %v91 = vrot.slane %v86, %v90
    %v95 = vcombine.high %v15, %v15
    %v97 = vunpack.c.l.s4 1983009808
    %v98 = vunpack.c.0.s8 %v97
    %v99 = vlaneseq
    %v100 = vshrl.u32 %v99, 7
    %v101 = vsub.s32 %v98, %v100
    %v102 = vrot.slane %v15, %v101
    %v104 = vunpack.c.l.s4 1983009808
    %v105 = vunpack.c.0.s8 %v104
    %v106 = vlaneseq
    %v107 = vshrl.u32 %v106, 7
    %v108 = vsub.s32 %v105, %v107
    %v109 = vrot.slane %v95, %v108
    %v110 = vcombine.high %v102, %v102
    %v111 = vcombine.high %v109, %v109
    %v113 = vunpack.c.l.s4 1983009808
    %v114 = vunpack.c.0.s8 %v113
    %v115 = vlaneseq
    %v116 = vshrl.u32 %v115, 7
    %v117 = vsub.s32 %v114, %v116
    %v118 = vrot.slane %v16, %v117
    %vm123 = vcmask 326656
    %v124 = vsel %vm123, %v118, 0
    %126 = vmatprep.subr.mxu0 0.0
    %127 = vmatpush1.msra.mxu0 %v17
    %128 = vmatprep.subr.mxu0 0.0
    %129 = vmatpush1.msra.mxu0 %v18
    %130 = vmatprep.subr.mxu0 0.0
    %131 = vmatpush1.msra.mxu0 %v19
    %132 = vmatprep.subr.mxu0 0.0
    %133 = vmatpush1.msra.mxu0 %v20
    %134 = vmatprep.subr.mxu0 0.0
    %135 = vmatpush1.msra.mxu0 %v21
    %136 = vmatprep.subr.mxu0 0.0
    %137 = vmatpush1.msra.mxu0 %v22
    %138 = vmatprep.subr.mxu0 0.0
    %139 = vmatpush1.msra.mxu0 %v23
    %140 = vmatprep.subr.mxu0 0.0
    %141 = vmatpush1.msra.mxu0 %v24
    %142 = vmatprep.subr.mxu0 0.0
    %143 = vmatpush1.msra.mxu0 %v25
    %144 = vmatprep.subr.mxu0 0.0
    %145 = vmatpush1.msra.mxu0 %v26
    %146 = vmatprep.subr.mxu0 0.0
    %147 = vmatpush1.msra.mxu0 %v27
    %148 = vmatprep.subr.mxu0 0.0
    %149 = vmatpush1.msra.mxu0 %v28
    %150 = vmatprep.subr.mxu0 0.0
    %151 = vmatpush1.msra.mxu0 %v29
    %152 = vmatprep.subr.mxu0 0.0
    %153 = vmatpush1.msra.mxu0 %v30
    %154 = vmatprep.subr.mxu0 0.0
    %155 = vmatpush1.msra.mxu0 %v31
    %156 = vmatprep.subr.mxu0 0.0
    %157 = vmatpush1.msra.mxu0 %v32
    %158 = vmatprep.subr.mxu0 0.0
    %159 = vmatpush1.msra.mxu0 %v33
    %160 = vmatprep.subr.mxu0 0.0
    %161 = vmatpush1.msra.mxu0 %v34
    %162 = vmatprep.subr.mxu0 0.0
    %163 = vmatpush1.msra.mxu0 %v35
    %164 = vmatprep.subr.mxu0 0.0
    %165 = vmatpush1.msra.mxu0 %v36
    %166 = vmatprep.subr.mxu0 0.0
    %167 = vmatpush1.msra.mxu0 %v37
    %168 = vmatprep.subr.mxu0 0.0
    %169 = vmatpush1.msra.mxu0 %v38
    %170 = vmatprep.subr.mxu0 0.0
    %171 = vmatpush1.msra.mxu0 %v39
    %172 = vmatprep.subr.mxu0 0.0
    %173 = vmatpush1.msra.mxu0 %v40
    %174 = vmatprep.subr.mxu0 0.0
    %175 = vmatpush1.msra.mxu0 %v41
    %176 = vmatprep.subr.mxu0 0.0
    %177 = vmatpush1.msra.mxu0 %v42
    %178 = vmatprep.subr.mxu0 0.0
    %179 = vmatpush1.msra.mxu0 %v43
    %180 = vmatprep.subr.mxu0 0.0
    %181 = vmatpush1.msra.mxu0 %v44
    %182 = vmatprep.subr.mxu0 0.0
    %183 = vmatpush1.msra.mxu0 %v45
    %184 = vmatprep.subr.mxu0 0.0
    %185 = vmatpush1.msra.mxu0 %v46
    %186 = vmatprep.subr.mxu0 0.0
    %187 = vmatpush1.msra.mxu0 %v47
    %188 = vmatprep.subr.mxu0 0.0
    %189 = vmatpush1.msra.mxu0 %v48
    %190 = vmatprep.mubr.f32.mxu0 %v110
    %191 = vmatmul.mubr.f32.gmra.mrb[0].mxu0 %v102
    %v192 = vpop.f32.mrb[0].mxu0
    %v193 = vadd.f32 %v91, %v192
    %v194 = vpop.f32.mrb[0].mxu0
    %195 = vdwg.mxu0
    %196 = vmatprep.subr.mxu0 0.0
    %197 = vmatpush1.msra.mxu0 %v49
    %198 = vmatprep.subr.mxu0 0.0
    %199 = vmatpush1.msra.mxu0 %v50
    %200 = vmatprep.subr.mxu0 0.0
    %201 = vmatpush1.msra.mxu0 %v51
    %202 = vmatprep.subr.mxu0 0.0
    %203 = vmatpush1.msra.mxu0 %v52
    %204 = vmatprep.subr.mxu0 0.0
    %205 = vmatpush1.msra.mxu0 %v53
    %206 = vmatprep.subr.mxu0 0.0
    %207 = vmatpush1.msra.mxu0 %v54
    %208 = vmatprep.subr.mxu0 0.0
    %209 = vmatpush1.msra.mxu0 %v55
    %210 = vmatprep.subr.mxu0 0.0
    %211 = vmatpush1.msra.mxu0 %v56
    %212 = vmatprep.subr.mxu0 0.0
    %213 = vmatpush1.msra.mxu0 %v57
    %214 = vmatprep.subr.mxu0 0.0
    %215 = vmatpush1.msra.mxu0 %v58
    %216 = vmatprep.subr.mxu0 0.0
    %217 = vmatpush1.msra.mxu0 %v59
    %218 = vmatprep.subr.mxu0 0.0
    %219 = vmatpush1.msra.mxu0 %v60
    %220 = vmatprep.subr.mxu0 0.0
    %221 = vmatpush1.msra.mxu0 %v61
    %222 = vmatprep.subr.mxu0 0.0
    %223 = vmatpush1.msra.mxu0 %v62
    %224 = vmatprep.subr.mxu0 0.0
    %225 = vmatpush1.msra.mxu0 %v63
    %226 = vmatprep.subr.mxu0 0.0
    %227 = vmatpush1.msra.mxu0 %v64
    %228 = vmatprep.subr.mxu0 0.0
    %229 = vmatpush1.msra.mxu0 %v65
    %230 = vmatprep.subr.mxu0 0.0
    %231 = vmatpush1.msra.mxu0 %v66
    %232 = vmatprep.subr.mxu0 0.0
    %233 = vmatpush1.msra.mxu0 %v67
    %234 = vmatprep.subr.mxu0 0.0
    %235 = vmatpush1.msra.mxu0 %v68
    %236 = vmatprep.subr.mxu0 0.0
    %237 = vmatpush1.msra.mxu0 %v69
    %238 = vmatprep.subr.mxu0 0.0
    %239 = vmatpush1.msra.mxu0 %v70
    %240 = vmatprep.subr.mxu0 0.0
    %241 = vmatpush1.msra.mxu0 %v71
    %242 = vmatprep.subr.mxu0 0.0
    %243 = vmatpush1.msra.mxu0 %v72
    %244 = vmatprep.subr.mxu0 0.0
    %245 = vmatpush1.msra.mxu0 %v73
    %246 = vmatprep.subr.mxu0 0.0
    %247 = vmatpush1.msra.mxu0 %v74
    %248 = vmatprep.subr.mxu0 0.0
    %249 = vmatpush1.msra.mxu0 %v75
    %250 = vmatprep.subr.mxu0 0.0
    %251 = vmatpush1.msra.mxu0 %v76
    %252 = vmatprep.subr.mxu0 0.0
    %253 = vmatpush1.msra.mxu0 %v77
    %254 = vmatprep.subr.mxu0 0.0
    %255 = vmatpush1.msra.mxu0 %v78
    %256 = vmatprep.subr.mxu0 0.0
    %257 = vmatpush1.msra.mxu0 %v79
    %258 = vmatprep.subr.mxu0 0.0
    %259 = vmatpush1.msra.mxu0 %v80
    %260 = vmatprep.mubr.f32.mxu0 %v111
    %261 = vmatmul.mubr.f32.gmra.mrb[0].mxu0 %v109
    %v262 = vpop.f32.mrb[0].mxu0
    %v263 = vadd.f32 %v193, %v262
    %v264 = vpop.f32.mrb[0].mxu0
    %265 = vdwg.mxu0
    %266 = vmatprep.subr.mxu0 0.0
    %267 = vmatpush1.msra.mxu0 %v81
    %268 = vmatprep.subr.mxu0 0.0
    %269 = vmatpush1.msra.mxu0 %v82
    %270 = vmatprep.subr.mxu0 0.0
    %271 = vmatpush1.msra.mxu0 %v83
    %272 = vmatprep.subr.mxu0 0.0
    %273 = vmatpush1.msra.mxu0 %v84
    %274 = vmatprep.subr.mxu0 0.0
    %275 = vmatpush1.msra.mxu0 %v85
    %276 = vmatprep.subr.mxu0 0.0
    %277 = vmatpush1.msra.mxu0 0.0
    %278 = vmatprep.subr.mxu0 0.0
    %279 = vmatpush1.msra.mxu0 0.0
    %280 = vmatprep.subr.mxu0 0.0
    %281 = vmatpush1.msra.mxu0 0.0
    %282 = vmatprep.subr.mxu0 0.0
    %283 = vmatpush1.msra.mxu0 0.0
    %284 = vmatprep.subr.mxu0 0.0
    %285 = vmatpush1.msra.mxu0 0.0
    %286 = vmatprep.subr.mxu0 0.0
    %287 = vmatpush1.msra.mxu0 0.0
    %288 = vmatprep.subr.mxu0 0.0
    %289 = vmatpush1.msra.mxu0 0.0
    %290 = vmatprep.subr.mxu0 0.0
    %291 = vmatpush1.msra.mxu0 0.0
    %292 = vmatprep.subr.mxu0 0.0
    %293 = vmatpush1.msra.mxu0 0.0
    %294 = vmatprep.subr.mxu0 0.0
    %295 = vmatpush1.msra.mxu0 0.0
    %296 = vmatprep.subr.mxu0 0.0
    %297 = vmatpush1.msra.mxu0 0.0
    %298 = vmatprep.subr.mxu0 0.0
    %299 = vmatpush1.msra.mxu0 0.0
    %300 = vmatprep.subr.mxu0 0.0
    %301 = vmatpush1.msra.mxu0 0.0
    %302 = vmatprep.subr.mxu0 0.0
    %303 = vmatpush1.msra.mxu0 0.0
    %304 = vmatprep.subr.mxu0 0.0
    %305 = vmatpush1.msra.mxu0 0.0
    %306 = vmatprep.subr.mxu0 0.0
    %307 = vmatpush1.msra.mxu0 0.0
    %308 = vmatprep.subr.mxu0 0.0
    %309 = vmatpush1.msra.mxu0 0.0
    %310 = vmatprep.subr.mxu0 0.0
    %311 = vmatpush1.msra.mxu0 0.0
    %312 = vmatprep.subr.mxu0 0.0
    %313 = vmatpush1.msra.mxu0 0.0
    %314 = vmatprep.subr.mxu0 0.0
    %315 = vmatpush1.msra.mxu0 0.0
    %316 = vmatprep.subr.mxu0 0.0
    %317 = vmatpush1.msra.mxu0 0.0
    %318 = vmatprep.subr.mxu0 0.0
    %319 = vmatpush1.msra.mxu0 0.0
    %320 = vmatprep.subr.mxu0 0.0
    %321 = vmatpush1.msra.mxu0 0.0
    %322 = vmatprep.subr.mxu0 0.0
    %323 = vmatpush1.msra.mxu0 0.0
    %324 = vmatprep.subr.mxu0 0.0
    %325 = vmatpush1.msra.mxu0 0.0
    %326 = vmatprep.subr.mxu0 0.0
    %327 = vmatpush1.msra.mxu0 0.0
    %328 = vmatprep.subr.mxu0 0.0
    %329 = vmatpush1.msra.mxu0 0.0
    %330 = vmatprep.mubr.f32.mxu0 0.0
    %331 = vmatmul.mubr.f32.gmra.mrb[0].mxu0 %v124
    %v332 = vpop.f32.mrb[0].mxu0
    %v333 = vadd.f32 %v263, %v332
    %v334 = vpop.f32.mrb[0].mxu0
    %335 = vdwg.mxu0
    %vm336 = vcmask 25600
    %v337 = vsel %vm336, %v333, -inf
    %338 = vmax.xlane.f32.xlu0 %v337
    %v339 = vpop.xlane.xlu0 %338
    %v340 = vsub.f32 %v333, %v339
    %v341 = vmul.f32 %v340, 1.442695
    %v342 = vpow.pop %v341
    %v343 = vsel %vm336, %v342, 0.0
    %344 = vadd.xlane.f32.xlu0 %v343
    %v345 = vpop.xlane.xlu0 %344
    %v346 = vlog2.pop %v345
    %v347 = vmul.f32 %v346, 0.6931472
    %v348 = vsub.f32 %v340, %v347
    %349 = vst.msk [vmem:[#allocation2] sm:$0x3] %vm336, %v348
    // Predicated region
    $region14: #{classifier_forward.1} parent=1 // pred_check
      _
    $region15: #{classifier_forward.1} parent=1 // pred_check_branch
      %351 = sbr.rel (0) target = $region17
    $region16: #{classifier_forward.1} parent=1 // pred_region
      %s353 = ssub.s32 32, 32
      %354 = vsyncadd [#allocation3], %s353
      %s356 = sshll.u32 [#allocation2], 4
      %s357 = int_to_ptr.vmem [resolvable:$true] %s356
      %359 = dma.vmem_to_hbm [thread:$0]  %s357, 32, %s3, [#allocation3]
    $region17: #{classifier_forward.1} parent=1 // pred_fallthru
      _
    // Predicated region
    $region18: #{classifier_forward.1} parent=1 // pred_check
      _
    $region19: #{classifier_forward.1} parent=1 // pred_check_branch
      %361 = sbr.rel (0) target = $region21
    $region20: #{classifier_forward.1} parent=1 // pred_region
      %362 = dma.done [#allocation3], 32
    $region21: #{classifier_forward.1} parent=1 // pred_fallthru
      _
    %363 = vsyncpa [#allocation3], 1

</llo_original>
